<compile_context>
chip_gen: v6e
topology: v6e:2x2x1
jax: 0.10.0
libtpu: 0.0.40
codegen_flags: <defaults>
</compile_context>

<pallas_src>
import math

import jax
import jax.numpy as jnp
from jax.experimental import pallas as pl
from jax.experimental.pallas import tpu as pltpu


def _round_up(x: int, m: int) -> int:
    return ((x + m - 1) // m) * m


def _depth_embedding_kernel(t_ref, freqs_ref, w1c_ref, w1s_ref, b1_ref,
                            w2_ref, b2_ref, o_ref):
    # t_ref: (TB, 1) f32; freqs_ref: (1, HALF_PAD) f32 (zero-padded past `half`).
    t = t_ref[...]                                   # (TB, 1)
    args = t * freqs_ref[...]                        # (TB, HALF_PAD)
    c = jnp.cos(args)                                # padded lanes -> cos(0)=1, hit zero W rows
    s = jnp.sin(args)                                # padded lanes -> sin(0)=0

    # h = [cos | sin] @ W1^T + b1  without the concatenate (split-W1 trick).
    h = (jnp.dot(c, w1c_ref[...], preferred_element_type=jnp.float32)
         + jnp.dot(s, w1s_ref[...], preferred_element_type=jnp.float32)
         + b1_ref[...])
    h = jnp.maximum(h, 0.0)

    y = jnp.dot(h, w2_ref[...], preferred_element_type=jnp.float32) + b2_ref[...]
    o_ref[...] = y.astype(o_ref.dtype)               # lane-dense (TB, D_PAD) store


def prepare_depth_embedding_params(w1, b1, w2, b2, *, max_period: float = 10000.0):
    """One-time parameter prep: transpose, split W1 into cos/sin halves, pad the
    feature axes to multiples of 128, and precompute freqs.

    w1, w2: torch-layout (out, in) = (d_model, d_model); b1, b2: (d_model,)."""
    d_model = int(w1.shape[0])
    assert d_model % 2 == 0, "d_model must be even (cos/sin halves)"
    half = d_model // 2
    half_pad = _round_up(half, 128)
    d_pad = _round_up(d_model, 128)

    freqs = jnp.exp((-math.log(max_period) / half)
                    * jnp.arange(half, dtype=jnp.float32))
    freqs = jnp.pad(freqs, (0, half_pad - half)).reshape(1, half_pad)

    w1t = jnp.transpose(w1).astype(jnp.float32)                  # (in, out)
    pad_rows = (0, half_pad - half)
    pad_cols = (0, d_pad - d_model)
    w1c = jnp.pad(w1t[:half], (pad_rows, pad_cols))              # (HALF_PAD, D_PAD)
    w1s = jnp.pad(w1t[half:], (pad_rows, pad_cols))
    b1p = jnp.pad(b1.astype(jnp.float32), pad_cols).reshape(1, d_pad)

    w2t = jnp.pad(jnp.transpose(w2).astype(jnp.float32),
                  (pad_cols, pad_cols))                          # (D_PAD, D_PAD)
    b2p = jnp.pad(b2.astype(jnp.float32), pad_cols).reshape(1, d_pad)

    return dict(freqs=freqs, w1c=w1c, w1s=w1s, b1=b1p, w2=w2t, b2=b2p,
                d_model=d_model, half_pad=half_pad, d_pad=d_pad)


def depth_embedding(t, params, *, max_rows_per_block: int = 512):
    """t: (B,) f32 depth values. Returns (B, d_model) f32."""
    d_model = params["d_model"]
    d_pad = params["d_pad"]
    half_pad = params["half_pad"]

    B = int(t.shape[0])
    b_min = _round_up(max(B, 8), 8)
    tb = b_min if b_min <= max_rows_per_block else _round_up(max_rows_per_block, 8)
    b_pad = _round_up(B, tb)
    grid = (b_pad // tb,)

    t_pad = jnp.pad(t.astype(jnp.float32), (0, b_pad - B)).reshape(b_pad, 1)

    flops = 2 * b_pad * (2 * half_pad * d_pad + d_pad * d_pad)
    transcendentals = 2 * b_pad * half_pad
    bytes_accessed = 4 * (b_pad + half_pad + 2 * half_pad * d_pad + 2 * d_pad
                          + d_pad * d_pad + b_pad * d_pad)

    resident = lambda i: (0, 0)   # weights/bias/freqs stay VMEM-resident across steps
    out = pl.pallas_call(
        _depth_embedding_kernel,
        out_shape=jax.ShapeDtypeStruct((b_pad, d_pad), jnp.float32),
        grid=grid,
        in_specs=[
            pl.BlockSpec((tb, 1), lambda i: (i, 0)),             # t
            pl.BlockSpec((1, half_pad), resident),               # freqs
            pl.BlockSpec((half_pad, d_pad), resident),           # W1_cos
            pl.BlockSpec((half_pad, d_pad), resident),           # W1_sin
            pl.BlockSpec((1, d_pad), resident),                  # b1
            pl.BlockSpec((d_pad, d_pad), resident),              # W2^T
            pl.BlockSpec((1, d_pad), resident),                  # b2
        ],
        out_specs=pl.BlockSpec((tb, d_pad), lambda i: (i, 0)),
        compiler_params=pltpu.CompilerParams(
            dimension_semantics=("parallel",)),
        cost_estimate=pl.CostEstimate(
            flops=flops, transcendentals=transcendentals,
            bytes_accessed=bytes_accessed),
    )(t_pad, params["freqs"], params["w1c"], params["w1s"], params["b1"],
      params["w2"], params["b2"])

    return out[:B, :d_model]


def _reference(t, w1, b1, w2, b2, max_period=10000.0):
    d_model = w1.shape[0]
    half = d_model // 2
    freqs = jnp.exp(-math.log(max_period)
                    * jnp.arange(0, half, dtype=jnp.float32) / half)
    args = t[:, None] * freqs[None]
    emb = jnp.concatenate([jnp.cos(args), jnp.sin(args)], axis=-1)
    h = jnp.maximum(emb @ w1.T + b1, 0.0)
    return h @ w2.T + b2


if __name__ == "__main__":
    d_model = 32
    B = 8

    key = jax.random.PRNGKey(0)
    k_t, k_w1, k_b1, k_w2, k_b2 = jax.random.split(key, 5)

    bound = 1.0 / math.sqrt(d_model)
    w1 = jax.random.uniform(k_w1, (d_model, d_model), jnp.float32, -bound, bound)
    b1 = jax.random.uniform(k_b1, (d_model,), jnp.float32, -bound, bound)
    w2 = jax.random.uniform(k_w2, (d_model, d_model), jnp.float32, -bound, bound)
    b2 = jax.random.uniform(k_b2, (d_model,), jnp.float32, -bound, bound)

    t = jax.random.uniform(k_t, (B,), jnp.float32, 0.0, 100.0)

    params = prepare_depth_embedding_params(w1, b1, w2, b2)   # one-time prep
    out = depth_embedding(t, params)
    out = jax.block_until_ready(out)

    ref = _reference(t, w1, b1, w2, b2)
    assert out.shape == (B, d_model)
    assert jnp.allclose(out, ref, atol=1e-4, rtol=1e-4), "mismatch vs reference"

    print("KERNEL_OK")
</pallas_src>

<mosaic_0001>
module attributes {stable_mosaic.version = 11 : i64} {
  func.func @_depth_embedding_kernel(%arg0: i32, %arg1: memref<8x1xf32, #tpu.memory_space<vmem>>, %arg2: memref<1x128xf32, #tpu.memory_space<vmem>>, %arg3: memref<128x128xf32, #tpu.memory_space<vmem>>, %arg4: memref<128x128xf32, #tpu.memory_space<vmem>>, %arg5: memref<1x128xf32, #tpu.memory_space<vmem>>, %arg6: memref<128x128xf32, #tpu.memory_space<vmem>>, %arg7: memref<1x128xf32, #tpu.memory_space<vmem>>, %arg8: memref<8x128xf32, #tpu.memory_space<vmem>>) attributes {dimension_semantics = [#tpu.dimension_semantics<parallel>], iteration_bounds = array<i64: 1>, scalar_prefetch = 0 : i64, scratch_operands = 0 : i64, tpu.core_type = #tpu.core_type<tc>, window_params = [{transform_indices = @transform_0, window_bounds = array<i64: 8, 1>}, {pipeline_mode = #tpu.pipeline_mode<synchronous>, transform_indices = @transform_1, window_bounds = array<i64: 1, 128>}, {pipeline_mode = #tpu.pipeline_mode<synchronous>, transform_indices = @transform_2, window_bounds = array<i64: 128, 128>}, {pipeline_mode = #tpu.pipeline_mode<synchronous>, transform_indices = @transform_3, window_bounds = array<i64: 128, 128>}, {pipeline_mode = #tpu.pipeline_mode<synchronous>, transform_indices = @transform_4, window_bounds = array<i64: 1, 128>}, {pipeline_mode = #tpu.pipeline_mode<synchronous>, transform_indices = @transform_5, window_bounds = array<i64: 128, 128>}, {pipeline_mode = #tpu.pipeline_mode<synchronous>, transform_indices = @transform_6, window_bounds = array<i64: 1, 128>}, {transform_indices = @transform_7, window_bounds = array<i64: 8, 128>}]} {
    %c0 = arith.constant 0 : index
    %c0_0 = arith.constant 0 : index
    %0 = vector.load %arg1[%c0, %c0_0] : memref<8x1xf32, #tpu.memory_space<vmem>>, vector<8x1xf32>
    %c0_1 = arith.constant 0 : index
    %c0_2 = arith.constant 0 : index
    %1 = vector.load %arg2[%c0_1, %c0_2] : memref<1x128xf32, #tpu.memory_space<vmem>>, vector<1x128xf32>
    %2 = vector.broadcast %0 : vector<8x1xf32> to vector<8x128xf32>
    %3 = vector.broadcast %1 : vector<1x128xf32> to vector<8x128xf32>
    %4 = arith.mulf %2, %3 : vector<8x128xf32>
    %5 = math.cos %4 : vector<8x128xf32>
    %6 = math.sin %4 : vector<8x128xf32>
    %c0_3 = arith.constant 0 : index
    %c0_4 = arith.constant 0 : index
    %7 = vector.load %arg3[%c0_3, %c0_4] : memref<128x128xf32, #tpu.memory_space<vmem>>, vector<128x128xf32>
    %cst = arith.constant dense<0.000000e+00> : vector<8x128xf32>
    %8 = tpu.matmul %5, %7, %cst {dimension_numbers = #tpu.dot_dimension_numbers<[1], [0], [0], [1], [0, 0, 1, 1], [], []>} : vector<8x128xf32>, vector<128x128xf32>, vector<8x128xf32> -> vector<8x128xf32>
    %c0_5 = arith.constant 0 : index
    %c0_6 = arith.constant 0 : index
    %9 = vector.load %arg4[%c0_5, %c0_6] : memref<128x128xf32, #tpu.memory_space<vmem>>, vector<128x128xf32>
    %cst_7 = arith.constant dense<0.000000e+00> : vector<8x128xf32>
    %10 = tpu.matmul %6, %9, %cst_7 {dimension_numbers = #tpu.dot_dimension_numbers<[1], [0], [0], [1], [0, 0, 1, 1], [], []>} : vector<8x128xf32>, vector<128x128xf32>, vector<8x128xf32> -> vector<8x128xf32>
    %11 = arith.addf %8, %10 : vector<8x128xf32>
    %c0_8 = arith.constant 0 : index
    %c0_9 = arith.constant 0 : index
    %12 = vector.load %arg5[%c0_8, %c0_9] : memref<1x128xf32, #tpu.memory_space<vmem>>, vector<1x128xf32>
    %13 = vector.broadcast %12 : vector<1x128xf32> to vector<8x128xf32>
    %14 = arith.addf %11, %13 : vector<8x128xf32>
    %cst_10 = arith.constant 0.000000e+00 : f32
    %15 = vector.broadcast %cst_10 : f32 to vector<8x128xf32>
    %16 = arith.maximumf %14, %15 : vector<8x128xf32>
    %c0_11 = arith.constant 0 : index
    %c0_12 = arith.constant 0 : index
    %17 = vector.load %arg6[%c0_11, %c0_12] : memref<128x128xf32, #tpu.memory_space<vmem>>, vector<128x128xf32>
    %cst_13 = arith.constant dense<0.000000e+00> : vector<8x128xf32>
    %18 = tpu.matmul %16, %17, %cst_13 {dimension_numbers = #tpu.dot_dimension_numbers<[1], [0], [0], [1], [0, 0, 1, 1], [], []>} : vector<8x128xf32>, vector<128x128xf32>, vector<8x128xf32> -> vector<8x128xf32>
    %c0_14 = arith.constant 0 : index
    %c0_15 = arith.constant 0 : index
    %19 = vector.load %arg7[%c0_14, %c0_15] : memref<1x128xf32, #tpu.memory_space<vmem>>, vector<1x128xf32>
    %20 = vector.broadcast %19 : vector<1x128xf32> to vector<8x128xf32>
    %21 = arith.addf %18, %20 : vector<8x128xf32>
    %c0_16 = arith.constant 0 : index
    %c0_17 = arith.constant 0 : index
    %22 = vector.load %arg8[%c0_16, %c0_17] : memref<8x128xf32, #tpu.memory_space<vmem>>, vector<8x128xf32>
    tpu.vector_store %arg8[%c0_16, %c0_17], %21 {strides = array<i32>} : memref<8x128xf32, #tpu.memory_space<vmem>>, vector<8x128xf32>,
    return
  }
  func.func @transform_0(%arg0: i32) -> (i32, i32) {
    %c0_i32 = arith.constant 0 : i32
    %c0_i32_0 = arith.constant 0 : i32
    return %arg0, %c0_i32 : i32, i32
  }
  func.func @transform_1(%arg0: i32) -> (i32, i32) {
    %c0_i32 = arith.constant 0 : i32
    %c0_i32_0 = arith.constant 0 : i32
    %c0_i32_1 = arith.constant 0 : i32
    return %c0_i32, %c0_i32_0 : i32, i32
  }
  func.func @transform_2(%arg0: i32) -> (i32, i32) {
    %c0_i32 = arith.constant 0 : i32
    %c0_i32_0 = arith.constant 0 : i32
    %c0_i32_1 = arith.constant 0 : i32
    return %c0_i32, %c0_i32_0 : i32, i32
  }
  func.func @transform_3(%arg0: i32) -> (i32, i32) {
    %c0_i32 = arith.constant 0 : i32
    %c0_i32_0 = arith.constant 0 : i32
    %c0_i32_1 = arith.constant 0 : i32
    return %c0_i32, %c0_i32_0 : i32, i32
  }
  func.func @transform_4(%arg0: i32) -> (i32, i32) {
    %c0_i32 = arith.constant 0 : i32
    %c0_i32_0 = arith.constant 0 : i32
    %c0_i32_1 = arith.constant 0 : i32
    return %c0_i32, %c0_i32_0 : i32, i32
  }
  func.func @transform_5(%arg0: i32) -> (i32, i32) {
    %c0_i32 = arith.constant 0 : i32
    %c0_i32_0 = arith.constant 0 : i32
    %c0_i32_1 = arith.constant 0 : i32
    return %c0_i32, %c0_i32_0 : i32, i32
  }
  func.func @transform_6(%arg0: i32) -> (i32, i32) {
    %c0_i32 = arith.constant 0 : i32
    %c0_i32_0 = arith.constant 0 : i32
    %c0_i32_1 = arith.constant 0 : i32
    return %c0_i32, %c0_i32_0 : i32, i32
  }
  func.func @transform_7(%arg0: i32) -> (i32, i32) {
    %c0_i32 = arith.constant 0 : i32
    %c0_i32_0 = arith.constant 0 : i32
    return %arg0, %c0_i32 : i32, i32
  }
}

</mosaic_0001>

<llo_original>
// kernel: tpu_custom_call.1
$region0: #{tpu_custom_call.1}
  #allocation0 [shape = 'u32[]', space=smem, size = 0x4, offset = 0x4, fixed_abs, tag = 'smem constant byte address 0x4 - core index']
  #allocation1 [shape = 'u32[144,128]{1,0:T(1,128)}', space=vmem, size = 0x12000, scoped, tag = 'internal scratch']
  %s0 = inlined_call_operand.vmem [shape: f32[8,1], index: 0, kind: input, shape index: {}]
  %s1 = inlined_call_operand.vmem [shape: f32[1,128], index: 1, kind: input, shape index: {}]
  %s2 = inlined_call_operand.hbm [shape: f32[128,128], index: 2, kind: input, shape index: {}]
  %s3 = inlined_call_operand.hbm [shape: f32[128,128], index: 3, kind: input, shape index: {}]
  %s4 = inlined_call_operand.vmem [shape: f32[1,128], index: 4, kind: input, shape index: {}]
  %s5 = inlined_call_operand.hbm [shape: f32[128,128], index: 5, kind: input, shape index: {}]
  %s6 = inlined_call_operand.vmem [shape: f32[1,128], index: 6, kind: input, shape index: {}]
  %s7 = inlined_call_operand.hbm [shape: f32[8,128], index: 7, kind: output, shape index: {}]
  %s8 = sld [smem:[#allocation0]]
  $region50: #{tpu_custom_call.1} parent=0
    _
  %s10 = ssub.s32 1, %s8
  %s11 = scalar_select 0, %s10, %s8
  $region1: #{tpu_custom_call.1} parent=0
    #allocation2 [shape = 'u8[65536]{0}', space=vmem, size = 0x10000, scoped, tag = 'input window, operand 2, single buffered']
    #allocation3 [shape = 's32[1]{0}', space=sflag, size = 0x4, scoped, tag = 'scoped memory for tpu_custom_call.1']
    #allocation4 [shape = 's32[1]{0}', space=sflag, size = 0x4, scoped, tag = 'scoped memory for tpu_custom_call.1']
    #allocation5 [shape = 'u8[65536]{0}', space=vmem, size = 0x10000, scoped, tag = 'input window, operand 3, single buffered']
    #allocation6 [shape = 's32[1]{0}', space=sflag, size = 0x4, scoped, tag = 'scoped memory for tpu_custom_call.1']
    #allocation7 [shape = 'u8[65536]{0}', space=vmem, size = 0x10000, scoped, tag = 'input window, operand 5, single buffered']
    #allocation8 [shape = 'u8[4096]{0}', space=vmem, size = 0x1000, scoped, tag = 'output window, operand 0, single buffered']
    %12 = vsyncpa [#allocation3], 0
    %13 = vsyncpa [#allocation6], 0
    %14 = vsyncpa [#allocation4], 0
    // Predicated region
    $region2: #{tpu_custom_call.1} parent=1 // pred_check
      _
    $region3: #{tpu_custom_call.1} parent=1 // pred_check_branch
      %16 = sbr.rel (0) target = $region5
    $region4: #{tpu_custom_call.1} parent=1 // pred_region
      _
    $region5: #{tpu_custom_call.1} parent=1 // pred_fallthru
      _
    // Predicated region
    $region6: #{tpu_custom_call.1} parent=1 // pred_check
      _
    $region7: #{tpu_custom_call.1} parent=1 // pred_check_branch
      %18 = sbr.rel (0) target = $region9
    $region8: #{tpu_custom_call.1} parent=1 // pred_region
      _
    $region9: #{tpu_custom_call.1} parent=1 // pred_fallthru
      _
    // Predicated region
    $region10: #{tpu_custom_call.1} parent=1 // pred_check
      _
    $region11: #{tpu_custom_call.1} parent=1 // pred_check_branch
      %20 = sbr.rel (0) target = $region13
    $region12: #{tpu_custom_call.1} parent=1 // pred_region
      %s22 = ssub.s32 2048, 2048
      %23 = vsyncadd [#allocation3], %s22
      %s24 = sshll.u32 [#allocation2], 4
      %s25 = int_to_ptr.vmem [resolvable:$true] %s24
      %30 = dma.hbm_to_vmem [thread:$0]  %s2, 2048, %s25, [#allocation3], 128, 128, 8
    $region13: #{tpu_custom_call.1} parent=1 // pred_fallthru
      _
    // Predicated region
    $region14: #{tpu_custom_call.1} parent=1 // pred_check
      _
    $region15: #{tpu_custom_call.1} parent=1 // pred_check_branch
      %32 = sbr.rel (0) target = $region17
    $region16: #{tpu_custom_call.1} parent=1 // pred_region
      %s34 = ssub.s32 2048, 2048
      %35 = vsyncadd [#allocation6], %s34
      %s36 = sshll.u32 [#allocation5], 4
      %s37 = int_to_ptr.vmem [resolvable:$true] %s36
      %42 = dma.hbm_to_vmem [thread:$0]  %s3, 2048, %s37, [#allocation6], 128, 128, 8
    $region17: #{tpu_custom_call.1} parent=1 // pred_fallthru
      _
    // Predicated region
    $region18: #{tpu_custom_call.1} parent=1 // pred_check
      _
    $region19: #{tpu_custom_call.1} parent=1 // pred_check_branch
      %44 = sbr.rel (0) target = $region21
    $region20: #{tpu_custom_call.1} parent=1 // pred_region
      _
    $region21: #{tpu_custom_call.1} parent=1 // pred_fallthru
      _
    // Predicated region
    $region22: #{tpu_custom_call.1} parent=1 // pred_check
      _
    $region23: #{tpu_custom_call.1} parent=1 // pred_check_branch
      %46 = sbr.rel (0) target = $region25
    $region24: #{tpu_custom_call.1} parent=1 // pred_region
      %s48 = ssub.s32 2048, 2048
      %49 = vsyncadd [#allocation6], %s48
      %s50 = sshll.u32 [#allocation7], 4
      %s51 = int_to_ptr.vmem [resolvable:$true] %s50
      %56 = dma.hbm_to_vmem [thread:$0]  %s5, 2048, %s51, [#allocation6], 128, 128, 8
    $region25: #{tpu_custom_call.1} parent=1 // pred_fallthru
      _
    // Predicated region
    $region26: #{tpu_custom_call.1} parent=1 // pred_check
      _
    $region27: #{tpu_custom_call.1} parent=1 // pred_check_branch
      %58 = sbr.rel (0) target = $region29
    $region28: #{tpu_custom_call.1} parent=1 // pred_region
      _
    $region29: #{tpu_custom_call.1} parent=1 // pred_fallthru
      _
    // Predicated region
    $region30: #{tpu_custom_call.1} parent=1 // pred_check
      _
    $region31: #{tpu_custom_call.1} parent=1 // pred_check_branch
      %60 = sbr.rel (0) target = $region33
    $region32: #{tpu_custom_call.1} parent=1 // pred_region
      %61 = dma.done [#allocation3], 2048
    $region33: #{tpu_custom_call.1} parent=1 // pred_fallthru
      _
    // Predicated region
    $region34: #{tpu_custom_call.1} parent=1 // pred_check
      _
    $region35: #{tpu_custom_call.1} parent=1 // pred_check_branch
      %63 = sbr.rel (0) target = $region37
    $region36: #{tpu_custom_call.1} parent=1 // pred_region
      %64 = dma.done [#allocation6], 2048
    $region37: #{tpu_custom_call.1} parent=1 // pred_fallthru
      _
    // Predicated region
    $region38: #{tpu_custom_call.1} parent=1 // pred_check
      _
    $region39: #{tpu_custom_call.1} parent=1 // pred_check_branch
      %66 = sbr.rel (0) target = $region41
    $region40: #{tpu_custom_call.1} parent=1 // pred_region
      %67 = dma.done [#allocation6], 2048
    $region41: #{tpu_custom_call.1} parent=1 // pred_fallthru
      _
    %v68 = vld [vmem:[%s0] sm:$0xff]
    %v69 = vld [vmem:[%s1] sm:$0x1]
    %71 = vset.pattern.permute.xlu0 0
    %72 = vperm.xlu0 %71, %v68
    %v73 = vpop.permute.xlu0 %72
    %v76 = vlaneseq
    %v77 = vshrl.u32 %v76, 7
    %v78 = vsub.s32 0, %v77
    %v79 = vrot.slane %v69, %v78
    %v81 = vmul.f32 %v73, %v79
    %v82 = vand.u32 2147483647, %v81
    %vm83 = vcmp.le.f32.partialorder %v82, 0.7853982
    %vm84 = vcmp.lt.s32.totalorder %v81, 0
    %v85 = vand.u32 %v81, 2139095040
    %v86 = vshrl.u32 %v85, 23
    %v87 = vsub.s32 %v86, 127
    %v88 = vand.u32 2147483647, %v81
    %v89 = vand.u32 %v88, 8388607
    %v90 = vor.u32 %v89, 8388608
    %v91 = vsub.s32 0, %v90
    %v92 = vadd.s32 %v87, 1
    %vm93 = vcmp.gt.s32.totalorder %v92, 0
    %v94 = vsel %vm93, %v92, 0
    %v95 = vshrl.u32 %v94, 5
    %v96 = vand.u32 %v94, 31
    %v97 = vsub.s32 32, %v96
    %v98 = vshrl.u32 683565275, %v97
    %v99 = vshll.u32 683565275, %v96
    %v100 = vshrl.u32 2475754826, %v97
    %v101 = vor.u32 %v99, %v100
    %v102 = vshll.u32 2475754826, %v96
    %v103 = vshrl.u32 2131351028, %v97
    %v104 = vor.u32 %v102, %v103
    %v105 = vshll.u32 2131351028, %v96
    %v106 = vshrl.u32 2102212464, %v97
    %v107 = vor.u32 %v105, %v106
    %v108 = vshll.u32 2102212464, %v96
    %v109 = vshrl.u32 920167782, %v97
    %v110 = vor.u32 %v108, %v109
    %v111 = vshll.u32 920167782, %v96
    %v112 = vshrl.u32 1326507024, %v97
    %v113 = vor.u32 %v111, %v112
    %vm114 = vcmp.lt.s32.totalorder %v95, 1
    %vm115 = vcmp.lt.s32.totalorder %v95, 2
    %vm116 = vcmp.lt.s32.totalorder %v95, 3
    %vm117 = vcmp.lt.s32.totalorder %v95, 4
    %v118 = vsel %vm114, %v98, %v101
    %v119 = vsel %vm117, %v107, 2102212464
    %v120 = vsel %vm116, %v104, %v119
    %v121 = vsel %vm115, %v118, %v120
    %v122 = vsel %vm114, %v101, %v104
    %v123 = vsel %vm117, %v110, 920167782
    %v124 = vsel %vm116, %v107, %v123
    %v125 = vsel %vm115, %v122, %v124
    %v126 = vsel %vm114, %v104, %v107
    %v127 = vsel %vm117, %v113, 1326507024
    %v128 = vsel %vm116, %v110, %v127
    %v129 = vsel %vm115, %v126, %v128
    %v130 = vshll.u32 %v90, 8
    %v131 = vmul.u32.u64.compose %v130, %v129
    %v132 = vextract.low.u32 %v131
    %v133 = vextract.high.u32 %v131
    %v134 = vmul.u32.u64.compose %v130, %v125
    %v135 = vextract.low.u32 %v134
    %v136 = vextract.high.u32 %v134
    %v137 = vmul.u32 %v130, %v121
    %v138 = vadd.s32 %v133, %v135
    %vm139 = vc.u32 %v133, %v135
    %v140 = vadd.s32 %v136, 1
    %v141 = vsel %vm139, %v140, %v136
    %v142 = vadd.s32 %v137, %v141
    %v143 = vadd.s32 %v142, 536870912
    %v144 = vshrl.u32 %v143, 30
    %v145 = vshll.u32 %v144, 30
    %v146 = vsub.s32 %v142, %v145
    %vm147 = vcmp.lt.s32.totalorder %v146, 0
    %v148 = vsub.s32 0, %v146
    %v149 = vsel %vm147, %v148, %v146
    %v150 = vclz %v149
    %v151 = vsub.s32 %v150, 2
    %vm152 = vcmp.gt.s32.totalorder 0, %v151
    %v153 = vsel %vm152, 0, %v151
    %v154 = vsub.s32 32, %v153
    %v155 = vshll.u32 %v146, %v153
    %v156 = vshrl.u32 %v138, %v154
    %v157 = vor.u32 %v155, %v156
    %v158 = vsub.s32 4294967266, %v153
    %v159 = vadd.s32 %v158, 127
    %v160 = vshll.u32 %v159, 23
    %v161 = vor.u32 4788187, %v160
    %v162 = vand.u32 2147483647, %v161
    %v164 = vcvt.s32.f32 %v157
    %v165 = vmul.f32 %v164, %v162
    %v166 = vxor.u32 %v165, 2147483648
    %v167 = vsel %vm84, %v166, %v165
    %v168 = vsub.s32 4, %v144
    %v169 = vsel %vm84, %v168, %v144
    %v170 = vsel %vm83, %v81, %v167
    %v171 = vsel %vm83, 0, %v169
    %v172 = vcosq.f32.pop %v170
    %v173 = vsinq.f32.pop %v170
    %vm174 = vweird.f32 %v81
    %v175 = vand.u32 %v171, 3
    %vm176 = vcmp.lt.s32.totalorder %v175, 2
    %vm177 = vcmp.eq.s32.totalorder %v175, 0
    %v178 = vxor.u32 %v173, 2147483648
    %v179 = vsel %vm177, %v172, %v178
    %vm180 = vcmp.eq.s32.totalorder %v175, 2
    %v181 = vxor.u32 %v172, 2147483648
    %v182 = vsel %vm180, %v181, %v173
    %v183 = vsel %vm176, %v179, %v182
    %v184 = vsel %vm174, nan, %v183
    %v185 = vand.u32 2147483647, %v81
    %vm186 = vcmp.le.f32.partialorder %v185, 0.7853982
    %vm187 = vcmp.lt.s32.totalorder %v81, 0
    %v188 = vand.u32 %v81, 2139095040
    %v189 = vshrl.u32 %v188, 23
    %v190 = vsub.s32 %v189, 127
    %v191 = vand.u32 2147483647, %v81
    %v192 = vand.u32 %v191, 8388607
    %v193 = vor.u32 %v192, 8388608
    %v194 = vsub.s32 0, %v193
    %v195 = vadd.s32 %v190, 1
    %vm196 = vcmp.gt.s32.totalorder %v195, 0
    %v197 = vsel %vm196, %v195, 0
    %v198 = vshrl.u32 %v197, 5
    %v199 = vand.u32 %v197, 31
    %v200 = vsub.s32 32, %v199
    %v201 = vshrl.u32 683565275, %v200
    %v202 = vshll.u32 683565275, %v199
    %v203 = vshrl.u32 2475754826, %v200
    %v204 = vor.u32 %v202, %v203
    %v205 = vshll.u32 2475754826, %v199
    %v206 = vshrl.u32 2131351028, %v200
    %v207 = vor.u32 %v205, %v206
    %v208 = vshll.u32 2131351028, %v199
    %v209 = vshrl.u32 2102212464, %v200
    %v210 = vor.u32 %v208, %v209
    %v211 = vshll.u32 2102212464, %v199
    %v212 = vshrl.u32 920167782, %v200
    %v213 = vor.u32 %v211, %v212
    %v214 = vshll.u32 920167782, %v199
    %v215 = vshrl.u32 1326507024, %v200
    %v216 = vor.u32 %v214, %v215
    %vm217 = vcmp.lt.s32.totalorder %v198, 1
    %vm218 = vcmp.lt.s32.totalorder %v198, 2
    %vm219 = vcmp.lt.s32.totalorder %v198, 3
    %vm220 = vcmp.lt.s32.totalorder %v198, 4
    %v221 = vsel %vm217, %v201, %v204
    %v222 = vsel %vm220, %v210, 2102212464
    %v223 = vsel %vm219, %v207, %v222
    %v224 = vsel %vm218, %v221, %v223
    %v225 = vsel %vm217, %v204, %v207
    %v226 = vsel %vm220, %v213, 920167782
    %v227 = vsel %vm219, %v210, %v226
    %v228 = vsel %vm218, %v225, %v227
    %v229 = vsel %vm217, %v207, %v210
    %v230 = vsel %vm220, %v216, 1326507024
    %v231 = vsel %vm219, %v213, %v230
    %v232 = vsel %vm218, %v229, %v231
    %v233 = vshll.u32 %v193, 8
    %v234 = vmul.u32.u64.compose %v233, %v232
    %v235 = vextract.low.u32 %v234
    %v236 = vextract.high.u32 %v234
    %v237 = vmul.u32.u64.compose %v233, %v228
    %v238 = vextract.low.u32 %v237
    %v239 = vextract.high.u32 %v237
    %v240 = vmul.u32 %v233, %v224
    %v241 = vadd.s32 %v236, %v238
    %vm242 = vc.u32 %v236, %v238
    %v243 = vadd.s32 %v239, 1
    %v244 = vsel %vm242, %v243, %v239
    %v245 = vadd.s32 %v240, %v244
    %v246 = vadd.s32 %v245, 536870912
    %v247 = vshrl.u32 %v246, 30
    %v248 = vshll.u32 %v247, 30
    %v249 = vsub.s32 %v245, %v248
    %vm250 = vcmp.lt.s32.totalorder %v249, 0
    %v251 = vsub.s32 0, %v249
    %v252 = vsel %vm250, %v251, %v249
    %v253 = vclz %v252
    %v254 = vsub.s32 %v253, 2
    %vm255 = vcmp.gt.s32.totalorder 0, %v254
    %v256 = vsel %vm255, 0, %v254
    %v257 = vsub.s32 32, %v256
    %v258 = vshll.u32 %v249, %v256
    %v259 = vshrl.u32 %v241, %v257
    %v260 = vor.u32 %v258, %v259
    %v261 = vsub.s32 4294967266, %v256
    %v262 = vadd.s32 %v261, 127
    %v263 = vshll.u32 %v262, 23
    %v264 = vor.u32 4788187, %v263
    %v265 = vand.u32 2147483647, %v264
    %v267 = vcvt.s32.f32 %v260
    %v268 = vmul.f32 %v267, %v265
    %v269 = vxor.u32 %v268, 2147483648
    %v270 = vsel %vm187, %v269, %v268
    %v271 = vsub.s32 4, %v247
    %v272 = vsel %vm187, %v271, %v247
    %v273 = vsel %vm186, %v81, %v270
    %v274 = vsel %vm186, 0, %v272
    %v275 = vcosq.f32.pop %v273
    %v276 = vsinq.f32.pop %v273
    %vm277 = vweird.f32 %v81
    %v278 = vadd.s32 %v274, 3
    %v279 = vand.u32 %v278, 3
    %vm280 = vcmp.lt.s32.totalorder %v279, 2
    %vm281 = vcmp.eq.s32.totalorder %v279, 0
    %v282 = vxor.u32 %v276, 2147483648
    %v283 = vsel %vm281, %v275, %v282
    %vm284 = vcmp.eq.s32.totalorder %v279, 2
    %v285 = vxor.u32 %v275, 2147483648
    %v286 = vsel %vm284, %v285, %v276
    %v287 = vsel %vm280, %v283, %v286
    %v288 = vsel %vm277, nan, %v287
    %v289 = vld [vmem:[#allocation2] sm:$0xff]
    %v290 = vld [vmem:[#allocation2 + $0x8] sm:$0xff]
    %v291 = vld [vmem:[#allocation2 + $0x10] sm:$0xff]
    %v292 = vld [vmem:[#allocation2 + $0x18] sm:$0xff]
    %v293 = vld [vmem:[#allocation2 + $0x20] sm:$0xff]
    %v294 = vld [vmem:[#allocation2 + $0x28] sm:$0xff]
    %v295 = vld [vmem:[#allocation2 + $0x30] sm:$0xff]
    %v296 = vld [vmem:[#allocation2 + $0x38] sm:$0xff]
    %v297 = vld [vmem:[#allocation2 + $0x40] sm:$0xff]
    %v298 = vld [vmem:[#allocation2 + $0x48] sm:$0xff]
    %v299 = vld [vmem:[#allocation2 + $0x50] sm:$0xff]
    %v300 = vld [vmem:[#allocation2 + $0x58] sm:$0xff]
    %v301 = vld [vmem:[#allocation2 + $0x60] sm:$0xff]
    %v302 = vld [vmem:[#allocation2 + $0x68] sm:$0xff]
    %v303 = vld [vmem:[#allocation2 + $0x70] sm:$0xff]
    %v304 = vld [vmem:[#allocation2 + $0x78] sm:$0xff]
    %v305 = vld [vmem:[#allocation5] sm:$0xff]
    %v306 = vld [vmem:[#allocation5 + $0x8] sm:$0xff]
    %v307 = vld [vmem:[#allocation5 + $0x10] sm:$0xff]
    %v308 = vld [vmem:[#allocation5 + $0x18] sm:$0xff]
    %v309 = vld [vmem:[#allocation5 + $0x20] sm:$0xff]
    %v310 = vld [vmem:[#allocation5 + $0x28] sm:$0xff]
    %v311 = vld [vmem:[#allocation5 + $0x30] sm:$0xff]
    %v312 = vld [vmem:[#allocation5 + $0x38] sm:$0xff]
    %v313 = vld [vmem:[#allocation5 + $0x40] sm:$0xff]
    %v314 = vld [vmem:[#allocation5 + $0x48] sm:$0xff]
    %v315 = vld [vmem:[#allocation5 + $0x50] sm:$0xff]
    %v316 = vld [vmem:[#allocation5 + $0x58] sm:$0xff]
    %v317 = vld [vmem:[#allocation5 + $0x60] sm:$0xff]
    %v318 = vld [vmem:[#allocation5 + $0x68] sm:$0xff]
    %v319 = vld [vmem:[#allocation5 + $0x70] sm:$0xff]
    %v320 = vld [vmem:[#allocation5 + $0x78] sm:$0xff]
    %321 = vmatprep.subr.mxu0 0.0
    %322 = vmatpush1.msra.mxu0 %v320
    %323 = vmatprep.subr.mxu0 0.0
    %324 = vmatpush1.msra.mxu0 %v319
    %325 = vmatprep.subr.mxu0 0.0
    %326 = vmatpush1.msra.mxu0 %v318
    %327 = vmatprep.subr.mxu0 0.0
    %328 = vmatpush1.msra.mxu0 %v317
    %329 = vmatprep.subr.mxu0 0.0
    %330 = vmatpush1.msra.mxu0 %v316
    %331 = vmatprep.subr.mxu0 0.0
    %332 = vmatpush1.msra.mxu0 %v315
    %333 = vmatprep.subr.mxu0 0.0
    %334 = vmatpush1.msra.mxu0 %v314
    %335 = vmatprep.subr.mxu0 0.0
    %336 = vmatpush1.msra.mxu0 %v313
    %337 = vmatprep.subr.mxu0 0.0
    %338 = vmatpush1.msra.mxu0 %v312
    %339 = vmatprep.subr.mxu0 0.0
    %340 = vmatpush1.msra.mxu0 %v311
    %341 = vmatprep.subr.mxu0 0.0
    %342 = vmatpush1.msra.mxu0 %v310
    %343 = vmatprep.subr.mxu0 0.0
    %344 = vmatpush1.msra.mxu0 %v309
    %345 = vmatprep.subr.mxu0 0.0
    %346 = vmatpush1.msra.mxu0 %v308
    %347 = vmatprep.subr.mxu0 0.0
    %348 = vmatpush1.msra.mxu0 %v307
    %349 = vmatprep.subr.mxu0 0.0
    %350 = vmatpush1.msra.mxu0 %v306
    %351 = vmatprep.subr.mxu0 0.0
    %352 = vmatpush1.msra.mxu0 %v305
    %353 = vmatprep.subr.mxu0 0.0
    %354 = vmatpush2.msra.mxu0 0.0
    %355 = vmatprep.subr.mxu0 0.0
    %356 = vmatpush2.msra.mxu0 0.0
    %357 = vmatprep.subr.mxu0 0.0
    %358 = vmatpush2.msra.mxu0 0.0
    %359 = vmatprep.subr.mxu0 0.0
    %360 = vmatpush2.msra.mxu0 0.0
    %361 = vmatprep.subr.mxu0 0.0
    %362 = vmatpush2.msra.mxu0 0.0
    %363 = vmatprep.subr.mxu0 0.0
    %364 = vmatpush2.msra.mxu0 0.0
    %365 = vmatprep.subr.mxu0 0.0
    %366 = vmatpush2.msra.mxu0 0.0
    %367 = vmatprep.subr.mxu0 0.0
    %368 = vmatpush2.msra.mxu0 0.0
    %369 = vmatprep.subr.mxu0 0.0
    %370 = vmatpush2.msra.mxu0 0.0
    %371 = vmatprep.subr.mxu0 0.0
    %372 = vmatpush2.msra.mxu0 0.0
    %373 = vmatprep.subr.mxu0 0.0
    %374 = vmatpush2.msra.mxu0 0.0
    %375 = vmatprep.subr.mxu0 0.0
    %376 = vmatpush2.msra.mxu0 0.0
    %377 = vmatprep.subr.mxu0 0.0
    %378 = vmatpush2.msra.mxu0 0.0
    %379 = vmatprep.subr.mxu0 0.0
    %380 = vmatpush2.msra.mxu0 0.0
    %381 = vmatprep.subr.mxu0 0.0
    %382 = vmatpush2.msra.mxu0 0.0
    %383 = vmatprep.subr.mxu0 0.0
    %384 = vmatpush2.msra.mxu0 0.0
    %385 = vmatprep.mubr.f32.mxu0 0.0
    %386 = vmatmul.mubr.f32.gmra.mxu0 %v288
    %v387 = vpop.f32.mrf.mxu0
    %v388 = vadd.f32 0.0, %v387
    %v389 = vpop.f32.mrf.mxu0
    %390 = vdwg.mxu0
    %391 = vmatprep.subr.mxu0 0.0
    %392 = vmatpush1.msra.mxu0 %v304
    %393 = vmatprep.subr.mxu0 0.0
    %394 = vmatpush1.msra.mxu0 %v303
    %395 = vmatprep.subr.mxu0 0.0
    %396 = vmatpush1.msra.mxu0 %v302
    %397 = vmatprep.subr.mxu0 0.0
    %398 = vmatpush1.msra.mxu0 %v301
    %399 = vmatprep.subr.mxu0 0.0
    %400 = vmatpush1.msra.mxu0 %v300
    %401 = vmatprep.subr.mxu0 0.0
    %402 = vmatpush1.msra.mxu0 %v299
    %403 = vmatprep.subr.mxu0 0.0
    %404 = vmatpush1.msra.mxu0 %v298
    %405 = vmatprep.subr.mxu0 0.0
    %406 = vmatpush1.msra.mxu0 %v297
    %407 = vmatprep.subr.mxu0 0.0
    %408 = vmatpush1.msra.mxu0 %v296
    %409 = vmatprep.subr.mxu0 0.0
    %410 = vmatpush1.msra.mxu0 %v295
    %411 = vmatprep.subr.mxu0 0.0
    %412 = vmatpush1.msra.mxu0 %v294
    %413 = vmatprep.subr.mxu0 0.0
    %414 = vmatpush1.msra.mxu0 %v293
    %415 = vmatprep.subr.mxu0 0.0
    %416 = vmatpush1.msra.mxu0 %v292
    %417 = vmatprep.subr.mxu0 0.0
    %418 = vmatpush1.msra.mxu0 %v291
    %419 = vmatprep.subr.mxu0 0.0
    %420 = vmatpush1.msra.mxu0 %v290
    %421 = vmatprep.subr.mxu0 0.0
    %422 = vmatpush1.msra.mxu0 %v289
    %423 = vmatprep.subr.mxu0 0.0
    %424 = vmatpush2.msra.mxu0 0.0
    %425 = vmatprep.subr.mxu0 0.0
    %426 = vmatpush2.msra.mxu0 0.0
    %427 = vmatprep.subr.mxu0 0.0
    %428 = vmatpush2.msra.mxu0 0.0
    %429 = vmatprep.subr.mxu0 0.0
    %430 = vmatpush2.msra.mxu0 0.0
    %431 = vmatprep.subr.mxu0 0.0
    %432 = vmatpush2.msra.mxu0 0.0
    %433 = vmatprep.subr.mxu0 0.0
    %434 = vmatpush2.msra.mxu0 0.0
    %435 = vmatprep.subr.mxu0 0.0
    %436 = vmatpush2.msra.mxu0 0.0
    %437 = vmatprep.subr.mxu0 0.0
    %438 = vmatpush2.msra.mxu0 0.0
    %439 = vmatprep.subr.mxu0 0.0
    %440 = vmatpush2.msra.mxu0 0.0
    %441 = vmatprep.subr.mxu0 0.0
    %442 = vmatpush2.msra.mxu0 0.0
    %443 = vmatprep.subr.mxu0 0.0
    %444 = vmatpush2.msra.mxu0 0.0
    %445 = vmatprep.subr.mxu0 0.0
    %446 = vmatpush2.msra.mxu0 0.0
    %447 = vmatprep.subr.mxu0 0.0
    %448 = vmatpush2.msra.mxu0 0.0
    %449 = vmatprep.subr.mxu0 0.0
    %450 = vmatpush2.msra.mxu0 0.0
    %451 = vmatprep.subr.mxu0 0.0
    %452 = vmatpush2.msra.mxu0 0.0
    %453 = vmatprep.subr.mxu0 0.0
    %454 = vmatpush2.msra.mxu0 0.0
    %455 = vmatprep.mubr.f32.mxu0 0.0
    %456 = vmatmul.mubr.f32.gmra.mxu0 %v184
    %v457 = vpop.f32.mrf.mxu0
    %v458 = vadd.f32 %v388, %v457
    %v459 = vpop.f32.mrf.mxu0
    %460 = vdwg.mxu0
    %v461 = vld [vmem:[%s4] sm:$0x1]
    %v463 = vlaneseq
    %v464 = vshrl.u32 %v463, 7
    %v465 = vsub.s32 0, %v464
    %v466 = vrot.slane %v461, %v465
    %v468 = vadd.f32 %v458, %v466
    %v469 = vmax.f32 %v468, 0.0
    %v470 = vld [vmem:[#allocation7] sm:$0xff]
    %v471 = vld [vmem:[#allocation7 + $0x8] sm:$0xff]
    %v472 = vld [vmem:[#allocation7 + $0x10] sm:$0xff]
    %v473 = vld [vmem:[#allocation7 + $0x18] sm:$0xff]
    %v474 = vld [vmem:[#allocation7 + $0x20] sm:$0xff]
    %v475 = vld [vmem:[#allocation7 + $0x28] sm:$0xff]
    %v476 = vld [vmem:[#allocation7 + $0x30] sm:$0xff]
    %v477 = vld [vmem:[#allocation7 + $0x38] sm:$0xff]
    %v478 = vld [vmem:[#allocation7 + $0x40] sm:$0xff]
    %v479 = vld [vmem:[#allocation7 + $0x48] sm:$0xff]
    %v480 = vld [vmem:[#allocation7 + $0x50] sm:$0xff]
    %v481 = vld [vmem:[#allocation7 + $0x58] sm:$0xff]
    %v482 = vld [vmem:[#allocation7 + $0x60] sm:$0xff]
    %v483 = vld [vmem:[#allocation7 + $0x68] sm:$0xff]
    %v484 = vld [vmem:[#allocation7 + $0x70] sm:$0xff]
    %v485 = vld [vmem:[#allocation7 + $0x78] sm:$0xff]
    %v486 = vld [vmem:[%s6] sm:$0x1]
    %v488 = vlaneseq
    %v489 = vshrl.u32 %v488, 7
    %v490 = vsub.s32 0, %v489
    %v491 = vrot.slane %v486, %v490
    %493 = vmatprep.subr.mxu0 0.0
    %494 = vmatpush1.msra.mxu0 %v485
    %495 = vmatprep.subr.mxu0 0.0
    %496 = vmatpush1.msra.mxu0 %v484
    %497 = vmatprep.subr.mxu0 0.0
    %498 = vmatpush1.msra.mxu0 %v483
    %499 = vmatprep.subr.mxu0 0.0
    %500 = vmatpush1.msra.mxu0 %v482
    %501 = vmatprep.subr.mxu0 0.0
    %502 = vmatpush1.msra.mxu0 %v481
    %503 = vmatprep.subr.mxu0 0.0
    %504 = vmatpush1.msra.mxu0 %v480
    %505 = vmatprep.subr.mxu0 0.0
    %506 = vmatpush1.msra.mxu0 %v479
    %507 = vmatprep.subr.mxu0 0.0
    %508 = vmatpush1.msra.mxu0 %v478
    %509 = vmatprep.subr.mxu0 0.0
    %510 = vmatpush1.msra.mxu0 %v477
    %511 = vmatprep.subr.mxu0 0.0
    %512 = vmatpush1.msra.mxu0 %v476
    %513 = vmatprep.subr.mxu0 0.0
    %514 = vmatpush1.msra.mxu0 %v475
    %515 = vmatprep.subr.mxu0 0.0
    %516 = vmatpush1.msra.mxu0 %v474
    %517 = vmatprep.subr.mxu0 0.0
    %518 = vmatpush1.msra.mxu0 %v473
    %519 = vmatprep.subr.mxu0 0.0
    %520 = vmatpush1.msra.mxu0 %v472
    %521 = vmatprep.subr.mxu0 0.0
    %522 = vmatpush1.msra.mxu0 %v471
    %523 = vmatprep.subr.mxu0 0.0
    %524 = vmatpush1.msra.mxu0 %v470
    %525 = vmatprep.subr.mxu0 0.0
    %526 = vmatpush2.msra.mxu0 0.0
    %527 = vmatprep.subr.mxu0 0.0
    %528 = vmatpush2.msra.mxu0 0.0
    %529 = vmatprep.subr.mxu0 0.0
    %530 = vmatpush2.msra.mxu0 0.0
    %531 = vmatprep.subr.mxu0 0.0
    %532 = vmatpush2.msra.mxu0 0.0
    %533 = vmatprep.subr.mxu0 0.0
    %534 = vmatpush2.msra.mxu0 0.0
    %535 = vmatprep.subr.mxu0 0.0
    %536 = vmatpush2.msra.mxu0 0.0
    %537 = vmatprep.subr.mxu0 0.0
    %538 = vmatpush2.msra.mxu0 0.0
    %539 = vmatprep.subr.mxu0 0.0
    %540 = vmatpush2.msra.mxu0 0.0
    %541 = vmatprep.subr.mxu0 0.0
    %542 = vmatpush2.msra.mxu0 0.0
    %543 = vmatprep.subr.mxu0 0.0
    %544 = vmatpush2.msra.mxu0 0.0
    %545 = vmatprep.subr.mxu0 0.0
    %546 = vmatpush2.msra.mxu0 0.0
    %547 = vmatprep.subr.mxu0 0.0
    %548 = vmatpush2.msra.mxu0 0.0
    %549 = vmatprep.subr.mxu0 0.0
    %550 = vmatpush2.msra.mxu0 0.0
    %551 = vmatprep.subr.mxu0 0.0
    %552 = vmatpush2.msra.mxu0 0.0
    %553 = vmatprep.subr.mxu0 0.0
    %554 = vmatpush2.msra.mxu0 0.0
    %555 = vmatprep.subr.mxu0 0.0
    %556 = vmatpush2.msra.mxu0 0.0
    %557 = vmatprep.mubr.f32.mxu0 0.0
    %558 = vmatmul.mubr.f32.gmra.mxu0 %v469
    %v559 = vpop.f32.mrf.mxu0
    %v560 = vadd.f32 %v491, %v559
    %v561 = vpop.f32.mrf.mxu0
    %562 = vdwg.mxu0
    %563 = vst [vmem:[#allocation8] sm:$0xff] %v560
    // Predicated region
    $region42: #{tpu_custom_call.1} parent=1 // pred_check
      _
    $region43: #{tpu_custom_call.1} parent=1 // pred_check_branch
      %565 = sbr.rel (0) target = $region45
    $region44: #{tpu_custom_call.1} parent=1 // pred_region
      %s567 = ssub.s32 128, 128
      %568 = vsyncadd [#allocation4], %s567
      %s570 = sshll.u32 [#allocation8], 4
      %s571 = int_to_ptr.vmem [resolvable:$true] %s570
      %573 = dma.vmem_to_hbm [thread:$0]  %s571, 128, %s7, [#allocation4]
    $region45: #{tpu_custom_call.1} parent=1 // pred_fallthru
      _
    // Predicated region
    $region46: #{tpu_custom_call.1} parent=1 // pred_check
      _
    $region47: #{tpu_custom_call.1} parent=1 // pred_check_branch
      %575 = sbr.rel (0) target = $region49
    $region48: #{tpu_custom_call.1} parent=1 // pred_region
      %576 = dma.done [#allocation4], 128
    $region49: #{tpu_custom_call.1} parent=1 // pred_fallthru
      _
    %577 = vsyncpa [#allocation3], 1
    %578 = vsyncpa [#allocation6], 1
    %579 = vsyncpa [#allocation4], 1

</llo_original>
